<compile_context>
chip_gen: v7x
topology: tpu7x:2x2x1
jax: 0.10.0
libtpu: 0.0.40
codegen_flags: <defaults>
</compile_context>

<pallas_src>
import functools
import math

import jax
import jax.numpy as jnp
from jax.experimental import pallas as pl
from jax.experimental.pallas import tpu as pltpu


# ---------------------------------------------------------------------------
# Activation selection (mirrors MLPActivationType)
# ---------------------------------------------------------------------------
def _activation_fn(name: str):
    if name == "silu":
        return jax.nn.silu
    if name == "relu":
        return lambda v: jnp.maximum(v, 0.0)
    if name == "gelu":
        # torch.nn.GELU default is the exact (erf) formulation
        return functools.partial(jax.nn.gelu, approximate=False)
    if name == "sigmoid":
        return jax.nn.sigmoid
    if name == "bilinear":
        return lambda v: v
    raise ValueError(f"unknown activation {name}")


# ---------------------------------------------------------------------------
# Pallas kernel: one (token-tile, F-tile) grid step
# ---------------------------------------------------------------------------
def _mlp_lora_kernel(x_ref, wg_ref, wu_ref, wd_ref, war_ref, wbr_ref, mask_ref,
                     o_ref, acc_ref, *, activation: str,
                     lora_combined_scale: float):
    act = _activation_fn(activation)
    f = pl.program_id(1)

    x = x_ref[...]                                                    # (Tt, H)

    # ---- LoRA branch: computed ONCE per token tile, seeds the accumulator --
    @pl.when(f == 0)
    def _init_with_lora():
        a = jnp.dot(x, war_ref[...], preferred_element_type=jnp.float32)   # (Tt, r)
        lora = jnp.dot(a.astype(wbr_ref.dtype), wbr_ref[...],
                       preferred_element_type=jnp.float32)                 # (Tt, H)
        # lora_alpha and 1/(1-p) folded into one scalar; mask holds 0/1 keep bits
        acc_ref[...] = (lora * lora_combined_scale) * mask_ref[...].astype(jnp.float32)

    # ---- GLU branch for this F tile, accumulated in f32 scratch ------------
    g = jnp.dot(x, wg_ref[...], preferred_element_type=jnp.float32)   # (Tt, tf)
    u = jnp.dot(x, wu_ref[...], preferred_element_type=jnp.float32)   # (Tt, tf)
    h = act(g) * u                                                     # f32 VPU math
    acc_ref[...] += jnp.dot(h.astype(wd_ref.dtype), wd_ref[...],
                            preferred_element_type=jnp.float32)        # (Tt, H)

    # ---- single unmasked lane-dense writeback on the last F step -----------
    @pl.when(f == pl.num_programs(1) - 1)
    def _store():
        o_ref[...] = acc_ref[...].astype(o_ref.dtype)


# ---------------------------------------------------------------------------
# Tiling helpers
# ---------------------------------------------------------------------------
def _round_up(x: int, m: int) -> int:
    return ((x + m - 1) // m) * m


def _pick_f_tile(total: int, requested: int, multiple: int = 128) -> int:
    """Largest divisor of `total` that is <= requested and a multiple of
    `multiple`; falls back to the full extent (always a legal block)."""
    req = min(requested, total)
    for cand in range(req, 0, -1):
        if total % cand == 0 and cand % multiple == 0:
            return cand
    return total


# ---------------------------------------------------------------------------
# Wrapper
# ---------------------------------------------------------------------------
def dense_mlp_with_lora(x, w_gate, w_up, w_down, w_ar, w_br, keep_mask,
                        *, activation="silu", lora_scale=1.0,
                        lora_dropout_rate=0.0, compute_dtype=None,
                        token_tile=128, f_tile=512):
    """x: [B, S, H]; weights are [in, out]; keep_mask: [B, S, H] of 0/1 bits."""
    out_dtype = x.dtype
    if compute_dtype is None:
        compute_dtype = x.dtype

    B, S, H = x.shape
    F = w_gate.shape[1]
    r = w_ar.shape[1]
    T = B * S

    # --- token tiling: sublane-aligned tile, pad ragged T ------------------
    tt = max(8, (min(token_tile, _round_up(T, 8)) // 8) * 8)
    T_pad = _round_up(T, tt)

    # --- FFN tiling: lane-aligned divisor of F ------------------------------
    tf = _pick_f_tile(F, f_tile, 128)

    x2 = x.reshape(T, H).astype(compute_dtype)
    mask2 = keep_mask.reshape(T, H).astype(compute_dtype)
    if T_pad != T:
        pad = ((0, T_pad - T), (0, 0))
        x2 = jnp.pad(x2, pad)
        mask2 = jnp.pad(mask2, pad)

    wg = w_gate.astype(compute_dtype)
    wu = w_up.astype(compute_dtype)
    wd = w_down.astype(compute_dtype)
    war = w_ar.astype(compute_dtype)
    wbr = w_br.astype(compute_dtype)

    keep_prob = 1.0 - float(lora_dropout_rate)
    combined_scale = float(lora_scale) / keep_prob if keep_prob > 0.0 else 0.0

    # --- explicit VMEM budget (double-buffered operands + f32 accumulator) --
    csize = jnp.dtype(compute_dtype).itemsize
    osize = jnp.dtype(out_dtype).itemsize
    vmem_est = (
        2 * (3 * H * tf * csize)          # gate/up/down F-tiles, double-buffered
        + 2 * 2 * tt * H * csize          # x + mask tiles, double-buffered
        + 2 * tt * H * osize              # output tile, double-buffered
        + tt * H * 4                      # f32 accumulator scratch
        + 2 * 2 * H * r * csize           # LoRA Ar/Br (tiny, resident)
    )
    vmem_limit = int(min(max(int(vmem_est * 1.5), 32 * 1024 * 1024),
                         56 * 1024 * 1024))

    kernel = functools.partial(_mlp_lora_kernel,
                               activation=activation,
                               lora_combined_scale=combined_scale)

    out2 = pl.pallas_call(
        kernel,
        out_shape=jax.ShapeDtypeStruct((T_pad, H), out_dtype),
        grid_spec=pltpu.PrefetchScalarGridSpec(
            num_scalar_prefetch=0,
            grid=(T_pad // tt, F // tf),
            in_specs=[
                pl.BlockSpec((tt, H), lambda i, f: (i, 0)),   # x tile (resident over F)
                pl.BlockSpec((H, tf), lambda i, f: (0, f)),   # Gate F-tile
                pl.BlockSpec((H, tf), lambda i, f: (0, f)),   # Up   F-tile
                pl.BlockSpec((tf, H), lambda i, f: (f, 0)),   # Down F-tile
                pl.BlockSpec((H, r), lambda i, f: (0, 0)),    # LoRA Ar (small)
                pl.BlockSpec((r, H), lambda i, f: (0, 0)),    # LoRA Br (small)
                pl.BlockSpec((tt, H), lambda i, f: (i, 0)),   # dropout keep bits
            ],
            out_specs=pl.BlockSpec((tt, H), lambda i, f: (i, 0)),
            scratch_shapes=[pltpu.VMEM((tt, H), jnp.float32)],
        ),
        compiler_params=pltpu.CompilerParams(
            dimension_semantics=("parallel", "arbitrary"),
            vmem_limit_bytes=vmem_limit,
        ),
    )(x2, wg, wu, wd, war, wbr, mask2)

    return out2[:T].reshape(B, S, H)


# ---------------------------------------------------------------------------
# Deterministic parameter init (shapes per the module's __init__)
# ---------------------------------------------------------------------------
def init_params(hidden_size, ffh_size, lora_rank, dtype=jnp.float32,
                init_base_seed=42, lora_init_base_seed=42):
    def kaiming_uniform(key, fan_in, shape):
        # matches torch kaiming_uniform_ bound = sqrt(2) * sqrt(3 / fan_in)
        bound = math.sqrt(2.0) * math.sqrt(3.0 / fan_in)
        return jax.random.uniform(key, shape, dtype, -bound, bound)

    # weights stored as [in_features, out_features]
    w_up = kaiming_uniform(jax.random.PRNGKey(init_base_seed + 1),
                           hidden_size, (hidden_size, ffh_size))
    w_gate = kaiming_uniform(jax.random.PRNGKey(init_base_seed + 2),
                             hidden_size, (hidden_size, ffh_size))
    w_down = kaiming_uniform(jax.random.PRNGKey(init_base_seed + 3),
                             ffh_size, (ffh_size, hidden_size))
    # LoRA weights: uniform [0, 1) like nn.init.uniform_
    w_ar = jax.random.uniform(jax.random.PRNGKey(lora_init_base_seed + 1),
                              (hidden_size, lora_rank), dtype)
    w_br = jax.random.uniform(jax.random.PRNGKey(lora_init_base_seed + 2),
                              (lora_rank, hidden_size), dtype)
    return w_gate, w_up, w_down, w_ar, w_br


# ---------------------------------------------------------------------------
# Pure-JAX reference for verification
# ---------------------------------------------------------------------------
def reference(x, w_gate, w_up, w_down, w_ar, w_br, keep_mask,
              activation, lora_scale, lora_dropout_rate):
    act = _activation_fn(activation)
    base = (act(x @ w_gate) * (x @ w_up)) @ w_down
    scale = lora_scale / (1.0 - lora_dropout_rate)
    lora = scale * ((x @ w_ar) @ w_br) * keep_mask
    return base + lora


if __name__ == "__main__":
    # Small shapes consistent with the module's forward: [B, S, H].
    # H is kept at 128 so the output stays lane-dense; tiles chosen so both
    # grid axes (tokens and F) have >1 step, exercising the accumulator path.
    B, S, H, F, R = 2, 16, 128, 256, 8
    dtype = jnp.float32

    activation = "silu"          # MLPActivationType.SILU (default)
    lora_rank = R
    lora_alpha = None            # -> defaults to lora_rank
    lora_dropout_rate = 0.1
    lora_scale = float(lora_alpha if lora_alpha is not None else lora_rank)

    key = jax.random.PRNGKey(0)
    k_x, k_drop = jax.random.split(key)

    x = jax.random.normal(k_x, (B, S, H), dtype)
    w_gate, w_up, w_down, w_ar, w_br = init_params(H, F, lora_rank, dtype)

    # Deterministic dropout keep bits (0/1); 1/(1-p) is folded in-kernel.
    # TODO(synk): generate the dropout mask in-kernel with pltpu.prng_seed /
    # pltpu.prng_random_bits to remove this HBM stream entirely.
    keep_mask = jax.random.bernoulli(
        k_drop, 1.0 - lora_dropout_rate, (B, S, H)).astype(dtype)

    # --- f32 path: exact check vs pure-JAX reference ------------------------
    out = dense_mlp_with_lora(
        x, w_gate, w_up, w_down, w_ar, w_br, keep_mask,
        activation=activation, lora_scale=lora_scale,
        lora_dropout_rate=lora_dropout_rate,
        token_tile=16, f_tile=128)
    out = jax.block_until_ready(out)

    ref = reference(x, w_gate, w_up, w_down, w_ar, w_br, keep_mask,
                    activation, lora_scale, lora_dropout_rate)
    assert out.shape == (B, S, H)
    assert jnp.allclose(out, ref, atol=1e-4, rtol=1e-4), "mismatch vs reference"

    # --- bf16 compute path (MXU-friendly on v6e/v7x): smoke test ------------
    out_bf16 = dense_mlp_with_lora(
        x, w_gate, w_up, w_down, w_ar, w_br, keep_mask,
        activation=activation, lora_scale=lora_scale,
        lora_dropout_rate=lora_dropout_rate,
        compute_dtype=jnp.bfloat16, token_tile=16, f_tile=128)
    out_bf16 = jax.block_until_ready(out_bf16)
    assert out_bf16.shape == (B, S, H)
    assert bool(jnp.all(jnp.isfinite(out_bf16.astype(jnp.float32))))

    print("KERNEL_OK")
</pallas_src>

<mosaic_0001>
module attributes {stable_mosaic.version = 11 : i64} {
  func.func @_mlp_lora_kernel(%arg0: i32, %arg1: i32, %arg2: memref<16x128xf32, #tpu.memory_space<vmem>>, %arg3: memref<128x128xf32, #tpu.memory_space<vmem>>, %arg4: memref<128x128xf32, #tpu.memory_space<vmem>>, %arg5: memref<128x128xf32, #tpu.memory_space<vmem>>, %arg6: memref<128x8xf32, #tpu.memory_space<vmem>>, %arg7: memref<8x128xf32, #tpu.memory_space<vmem>>, %arg8: memref<16x128xf32, #tpu.memory_space<vmem>>, %arg9: memref<16x128xf32, #tpu.memory_space<vmem>>, %arg10: memref<16x128xf32, #tpu.memory_space<vmem>>) attributes {dimension_semantics = [#tpu.dimension_semantics<parallel>, #tpu.dimension_semantics<arbitrary>], iteration_bounds = array<i64: 2, 2>, scalar_prefetch = 0 : i64, scratch_operands = 1 : i64, tpu.core_type = #tpu.core_type<tc>, window_params = [{transform_indices = @transform_0, window_bounds = array<i64: 16, 128>}, {transform_indices = @transform_1, window_bounds = array<i64: 128, 128>}, {transform_indices = @transform_2, window_bounds = array<i64: 128, 128>}, {transform_indices = @transform_3, window_bounds = array<i64: 128, 128>}, {pipeline_mode = #tpu.pipeline_mode<synchronous>, transform_indices = @transform_4, window_bounds = array<i64: 128, 8>}, {pipeline_mode = #tpu.pipeline_mode<synchronous>, transform_indices = @transform_5, window_bounds = array<i64: 8, 128>}, {transform_indices = @transform_6, window_bounds = array<i64: 16, 128>}, {transform_indices = @transform_7, window_bounds = array<i64: 16, 128>}]} {
    %c0 = arith.constant 0 : index
    %c0_0 = arith.constant 0 : index
    %0 = vector.load %arg2[%c0, %c0_0] : memref<16x128xf32, #tpu.memory_space<vmem>>, vector<16x128xf32>
    %c0_i32 = arith.constant 0 : i32
    %1 = arith.cmpi eq, %arg1, %c0_i32 : i32
    %2 = arith.extui %1 : i1 to i32
    %c0_i32_1 = arith.constant 0 : i32
    %3 = arith.cmpi ne, %2, %c0_i32_1 : i32
    scf.if %3 {
      %c0_16 = arith.constant 0 : index
      %c0_17 = arith.constant 0 : index
      %23 = vector.load %arg6[%c0_16, %c0_17] : memref<128x8xf32, #tpu.memory_space<vmem>>, vector<128x8xf32>
      %cst_18 = arith.constant dense<0.000000e+00> : vector<16x8xf32>
      %24 = tpu.matmul %0, %23, %cst_18 {dimension_numbers = #tpu.dot_dimension_numbers<[1], [0], [0], [1], [0, 0, 1, 1], [], []>} : vector<16x128xf32>, vector<128x8xf32>, vector<16x8xf32> -> vector<16x8xf32>
      %c0_19 = arith.constant 0 : index
      %c0_20 = arith.constant 0 : index
      %25 = vector.load %arg7[%c0_19, %c0_20] : memref<8x128xf32, #tpu.memory_space<vmem>>, vector<8x128xf32>
      %cst_21 = arith.constant dense<0.000000e+00> : vector<16x128xf32>
      %26 = tpu.matmul %24, %25, %cst_21 {dimension_numbers = #tpu.dot_dimension_numbers<[1], [0], [0], [1], [0, 0, 1, 1], [], []>} : vector<16x8xf32>, vector<8x128xf32>, vector<16x128xf32> -> vector<16x128xf32>
      %cst_22 = arith.constant 8.88888931 : f32
      %27 = vector.broadcast %cst_22 : f32 to vector<16x128xf32>
      %28 = arith.mulf %26, %27 : vector<16x128xf32>
      %c0_23 = arith.constant 0 : index
      %c0_24 = arith.constant 0 : index
      %29 = vector.load %arg8[%c0_23, %c0_24] : memref<16x128xf32, #tpu.memory_space<vmem>>, vector<16x128xf32>
      %30 = arith.mulf %28, %29 : vector<16x128xf32>
      %c0_25 = arith.constant 0 : index
      %c0_26 = arith.constant 0 : index
      %31 = vector.load %arg10[%c0_25, %c0_26] : memref<16x128xf32, #tpu.memory_space<vmem>>, vector<16x128xf32>
      tpu.vector_store %arg10[%c0_25, %c0_26], %30 {strides = array<i32>} : memref<16x128xf32, #tpu.memory_space<vmem>>, vector<16x128xf32>,
    } else {
    }
    %c0_2 = arith.constant 0 : index
    %c0_3 = arith.constant 0 : index
    %4 = vector.load %arg3[%c0_2, %c0_3] : memref<128x128xf32, #tpu.memory_space<vmem>>, vector<128x128xf32>
    %cst = arith.constant dense<0.000000e+00> : vector<16x128xf32>
    %5 = tpu.matmul %0, %4, %cst {dimension_numbers = #tpu.dot_dimension_numbers<[1], [0], [0], [1], [0, 0, 1, 1], [], []>} : vector<16x128xf32>, vector<128x128xf32>, vector<16x128xf32> -> vector<16x128xf32>
    %c0_4 = arith.constant 0 : index
    %c0_5 = arith.constant 0 : index
    %6 = vector.load %arg4[%c0_4, %c0_5] : memref<128x128xf32, #tpu.memory_space<vmem>>, vector<128x128xf32>
    %cst_6 = arith.constant dense<0.000000e+00> : vector<16x128xf32>
    %7 = tpu.matmul %0, %6, %cst_6 {dimension_numbers = #tpu.dot_dimension_numbers<[1], [0], [0], [1], [0, 0, 1, 1], [], []>} : vector<16x128xf32>, vector<128x128xf32>, vector<16x128xf32> -> vector<16x128xf32>
    %8 = arith.negf %5 : vector<16x128xf32>
    %9 = math.exp %8 : vector<16x128xf32>
    %cst_7 = arith.constant 1.000000e+00 : f32
    %10 = vector.broadcast %cst_7 : f32 to vector<16x128xf32>
    %11 = arith.addf %10, %9 : vector<16x128xf32>
    %12 = arith.divf %10, %11 : vector<16x128xf32>
    %13 = arith.mulf %5, %12 : vector<16x128xf32>
    %14 = arith.mulf %13, %7 : vector<16x128xf32>
    %c0_8 = arith.constant 0 : index
    %c0_9 = arith.constant 0 : index
    %15 = vector.load %arg10[%c0_8, %c0_9] : memref<16x128xf32, #tpu.memory_space<vmem>>, vector<16x128xf32>
    %c0_10 = arith.constant 0 : index
    %c0_11 = arith.constant 0 : index
    %16 = vector.load %arg5[%c0_10, %c0_11] : memref<128x128xf32, #tpu.memory_space<vmem>>, vector<128x128xf32>
    %cst_12 = arith.constant dense<0.000000e+00> : vector<16x128xf32>
    %17 = tpu.matmul %14, %16, %cst_12 {dimension_numbers = #tpu.dot_dimension_numbers<[1], [0], [0], [1], [0, 0, 1, 1], [], []>} : vector<16x128xf32>, vector<128x128xf32>, vector<16x128xf32> -> vector<16x128xf32>
    %18 = arith.addf %15, %17 : vector<16x128xf32>
    %c0_13 = arith.constant 0 : index
    %c0_14 = arith.constant 0 : index
    %19 = vector.load %arg10[%c0_13, %c0_14] : memref<16x128xf32, #tpu.memory_space<vmem>>, vector<16x128xf32>
    tpu.vector_store %arg10[%c0_13, %c0_14], %18 {strides = array<i32>} : memref<16x128xf32, #tpu.memory_space<vmem>>, vector<16x128xf32>,
    %c1_i32 = arith.constant 1 : i32
    %20 = arith.cmpi eq, %arg1, %c1_i32 : i32
    %21 = arith.extui %20 : i1 to i32
    %c0_i32_15 = arith.constant 0 : i32
    %22 = arith.cmpi ne, %21, %c0_i32_15 : i32
    scf.if %22 {
      %c0_16 = arith.constant 0 : index
      %c0_17 = arith.constant 0 : index
      %23 = vector.load %arg10[%c0_16, %c0_17] : memref<16x128xf32, #tpu.memory_space<vmem>>, vector<16x128xf32>
      %c0_18 = arith.constant 0 : index
      %c0_19 = arith.constant 0 : index
      %24 = vector.load %arg9[%c0_18, %c0_19] : memref<16x128xf32, #tpu.memory_space<vmem>>, vector<16x128xf32>
      tpu.vector_store %arg9[%c0_18, %c0_19], %23 {strides = array<i32>} : memref<16x128xf32, #tpu.memory_space<vmem>>, vector<16x128xf32>,
    } else {
    }
    return
  }
  func.func @transform_0(%arg0: i32, %arg1: i32) -> (i32, i32) {
    %c0_i32 = arith.constant 0 : i32
    %c0_i32_0 = arith.constant 0 : i32
    return %arg0, %c0_i32 : i32, i32
  }
  func.func @transform_1(%arg0: i32, %arg1: i32) -> (i32, i32) {
    %c0_i32 = arith.constant 0 : i32
    %c0_i32_0 = arith.constant 0 : i32
    return %c0_i32, %arg1 : i32, i32
  }
  func.func @transform_2(%arg0: i32, %arg1: i32) -> (i32, i32) {
    %c0_i32 = arith.constant 0 : i32
    %c0_i32_0 = arith.constant 0 : i32
    return %c0_i32, %arg1 : i32, i32
  }
  func.func @transform_3(%arg0: i32, %arg1: i32) -> (i32, i32) {
    %c0_i32 = arith.constant 0 : i32
    %c0_i32_0 = arith.constant 0 : i32
    return %arg1, %c0_i32 : i32, i32
  }
  func.func @transform_4(%arg0: i32, %arg1: i32) -> (i32, i32) {
    %c0_i32 = arith.constant 0 : i32
    %c0_i32_0 = arith.constant 0 : i32
    %c0_i32_1 = arith.constant 0 : i32
    return %c0_i32, %c0_i32_0 : i32, i32
  }
  func.func @transform_5(%arg0: i32, %arg1: i32) -> (i32, i32) {
    %c0_i32 = arith.constant 0 : i32
    %c0_i32_0 = arith.constant 0 : i32
    %c0_i32_1 = arith.constant 0 : i32
    return %c0_i32, %c0_i32_0 : i32, i32
  }
  func.func @transform_6(%arg0: i32, %arg1: i32) -> (i32, i32) {
    %c0_i32 = arith.constant 0 : i32
    %c0_i32_0 = arith.constant 0 : i32
    return %arg0, %c0_i32 : i32, i32
  }
  func.func @transform_7(%arg0: i32, %arg1: i32) -> (i32, i32) {
    %c0_i32 = arith.constant 0 : i32
    %c0_i32_0 = arith.constant 0 : i32
    return %arg0, %c0_i32 : i32, i32
  }
}

</mosaic_0001>

<llo_original>
// kernel: tpu_custom_call.1
$region0: #{tpu_custom_call.1}
  #allocation0 [shape = 'u32[]', space=smem, size = 0x4, offset = 0x4, fixed_abs, tag = 'smem constant byte address 0x4 - core index']
  #allocation1 [shape = 'u32[144,128]{1,0:T(1,128)}', space=vmem, size = 0x12000, scoped, tag = 'internal scratch']
  #allocation2 [shape = 'f32[16,128]{1,0:T(8,128)}', space=vmem, size = 0x2000, scoped, tag = 'scratch operand']
  %s0 = inlined_call_operand.vmem [shape: f32[32,128], index: 0, kind: input, shape index: {}]
  %s1 = inlined_call_operand.hbm [shape: f32[128,256], index: 1, kind: input, shape index: {}]
  %s2 = inlined_call_operand.hbm [shape: f32[128,256], index: 2, kind: input, shape index: {}]
  %s3 = inlined_call_operand.hbm [shape: f32[256,128], index: 3, kind: input, shape index: {}]
  %s4 = inlined_call_operand.vmem [shape: f32[128,8], index: 4, kind: input, shape index: {}]
  %s5 = inlined_call_operand.vmem [shape: f32[8,128], index: 5, kind: input, shape index: {}]
  %s6 = inlined_call_operand.vmem [shape: f32[32,128], index: 6, kind: input, shape index: {}]
  %s7 = inlined_call_operand.hbm [shape: f32[32,128], index: 7, kind: output, shape index: {}]
  %s8 = sld [smem:[#allocation0]]
  $region81: #{tpu_custom_call.1} parent=0
    _
  %s10 = ssub.s32 1, %s8
  %s11 = scalar_select 0, %s10, %s8
  $region1: #{tpu_custom_call.1} parent=0
    #allocation3 [shape = 'u8[131072]{0}', space=vmem, size = 0x20000, scoped, tag = 'input window, operand 1']
    #allocation4 [shape = 's32[2]{0}', space=sflag, size = 0x8, scoped, tag = 'scoped memory for tpu_custom_call.1']
    #allocation5 [shape = 's32[2]{0}', space=sflag, size = 0x8, scoped, tag = 'scoped memory for tpu_custom_call.1']
    #allocation6 [shape = 'u8[131072]{0}', space=vmem, size = 0x20000, scoped, tag = 'input window, operand 2']
    #allocation7 [shape = 's32[2]{0}', space=sflag, size = 0x8, scoped, tag = 'scoped memory for tpu_custom_call.1']
    #allocation8 [shape = 'u8[131072]{0}', space=vmem, size = 0x20000, scoped, tag = 'input window, operand 3']
    #allocation9 [shape = 'u8[16384]{0}', space=vmem, size = 0x4000, scoped, tag = 'output window, operand 0']
    %12 = vsyncpa [#allocation4], 0
    %s13 = scalar_lea.sflag [#allocation4], 1
    %14 = vsyncpa %s13, 0
    %15 = vsyncpa [#allocation7], 0
    %s16 = scalar_lea.sflag [#allocation7], 1
    %17 = vsyncpa %s16, 0
    %18 = vsyncpa [#allocation5], 0
    %s19 = scalar_lea.sflag [#allocation5], 1
    %20 = vsyncpa %s19, 0
    loop: start=0, step=1, limit=6
    $region2: #{tpu_custom_call.1} parent=1 // loop_pre_header
      _
    $region3: #{tpu_custom_call.1} parent=1 // loop_header
      %s22 = sphi 0, %s26
      %p23 = scmp.ge.s32.totalorder %s22, 6
      %s29 = sphi 0, %s41
      %s30 = sphi 0, %s37
      %s31 = sphi 0, %s29
      %s32 = sphi 0, %s30
      %s33 = sphi 0, %s31
      %s34 = sphi 0, %s32
      %s44 = sphi 0, %s46
      %s47 = sphi 0, %s44
      %s48 = sphi 0, %s47
      %s64 = sphi 0, %s48
      %s70 = sphi 0, %s72
      %s73 = sphi 0, %s70
      %s74 = sphi 0, %s73
      %s90 = sphi 0, %s74
      %s96 = sphi 0, %s98
      %s99 = sphi 0, %s96
      %s100 = sphi 0, %s99
      %s116 = sphi 0, %s100
      %s122 = sphi 0, %s124
      %s125 = sphi 0, %s122
      %s126 = sphi 0, %s125
      %s142 = sphi 0, %s126
      %s146 = sphi 0, %s146
      %s148 = sphi 0, %s146
      %s149 = sphi 0, %s148
      %s163 = sphi 0, %s149
      %s167 = sphi 0, %s167
      %s169 = sphi 0, %s167
      %s170 = sphi 0, %s169
      %s184 = sphi 0, %s170
      %s190 = sphi 0, %s192
      %s193 = sphi 0, %s190
      %s194 = sphi 0, %s193
      %s210 = sphi 0, %s194
      %s216 = sphi 0, %s218
      %s219 = sphi 0, %s216
      %s220 = sphi 0, %s219
      %s236 = sphi 0, %s220
    $region4: #{tpu_custom_call.1} parent=1 // loop_header_branch
      %25 = sbr.rel (%p23) target = $region8
    $region5: #{tpu_custom_call.1} parent=1 // loop_body
      %s27 = ssub.s32 %s22, 1
      %s28 = ssub.s32 %s22, 2
      %s35 = sadd.s32 1, %s30
      %p36 = scmp.ge.s32.totalorder %s35, 2
      %s37 = scalar_select %p36, 0, %s35
      %s38 = sadd.s32 1, %s29
      %s39 = scalar_select %p36, %s38, %s29
      %p40 = scmp.ge.s32.totalorder %s39, 2
      %s41 = scalar_select %p40, 0, %s39
      %s42 = ssub.s32 %s29, %s41
      %p43 = scmp.eq.s32.totalorder %s42, 0
      %s45 = sadd.s32 %s44, 1
      %s46 = scalar_select %p43, %s44, %s45
      %p49 = pneg %p43
      %p50 = scmp.eq.s32.totalorder %s22, 3
      %p51 = por %p49, %p50
      %p52 = scmp.ne.s32.totalorder %s44, %s47
      %p53 = scmp.eq.s32.totalorder %s22, 0
      %p54 = por %p52, %p53
      %p55 = scmp.ne.s32.totalorder %s44, %s47
      %p56 = scmp.eq.s32.totalorder %s27, 3
      %p57 = por %p55, %p56
      %p58 = scmp.ne.s32.totalorder %s47, %s48
      %p59 = scmp.eq.s32.totalorder %s27, 0
      %p60 = por %p58, %p59
      %p61 = scmp.ne.s32.totalorder %s47, %s48
      %p62 = scmp.eq.s32.totalorder %s28, 3
      %p63 = por %p61, %p62
      %p65 = scmp.ne.s32.totalorder %s48, %s64
      %p66 = scmp.eq.s32.totalorder %s28, 0
      %p67 = por %p65, %p66
      %s68 = ssub.s32 %s30, %s37
      %p69 = scmp.eq.s32.totalorder %s68, 0
      %s71 = sadd.s32 %s70, 1
      %s72 = scalar_select %p69, %s70, %s71
      %p75 = pneg %p69
      %p76 = scmp.eq.s32.totalorder %s22, 3
      %p77 = por %p75, %p76
      %p78 = scmp.ne.s32.totalorder %s70, %s73
      %p79 = scmp.eq.s32.totalorder %s22, 0
      %p80 = por %p78, %p79
      %p81 = scmp.ne.s32.totalorder %s70, %s73
      %p82 = scmp.eq.s32.totalorder %s27, 3
      %p83 = por %p81, %p82
      %p84 = scmp.ne.s32.totalorder %s73, %s74
      %p85 = scmp.eq.s32.totalorder %s27, 0
      %p86 = por %p84, %p85
      %p87 = scmp.ne.s32.totalorder %s73, %s74
      %p88 = scmp.eq.s32.totalorder %s28, 3
      %p89 = por %p87, %p88
      %p91 = scmp.ne.s32.totalorder %s74, %s90
      %p92 = scmp.eq.s32.totalorder %s28, 0
      %p93 = por %p91, %p92
      %s94 = ssub.s32 %s30, %s37
      %p95 = scmp.eq.s32.totalorder %s94, 0
      %s97 = sadd.s32 %s96, 1
      %s98 = scalar_select %p95, %s96, %s97
      %p101 = pneg %p95
      %p102 = scmp.eq.s32.totalorder %s22, 3
      %p103 = por %p101, %p102
      %p104 = scmp.ne.s32.totalorder %s96, %s99
      %p105 = scmp.eq.s32.totalorder %s22, 0
      %p106 = por %p104, %p105
      %p107 = scmp.ne.s32.totalorder %s96, %s99
      %p108 = scmp.eq.s32.totalorder %s27, 3
      %p109 = por %p107, %p108
      %p110 = scmp.ne.s32.totalorder %s99, %s100
      %p111 = scmp.eq.s32.totalorder %s27, 0
      %p112 = por %p110, %p111
      %p113 = scmp.ne.s32.totalorder %s99, %s100
      %p114 = scmp.eq.s32.totalorder %s28, 3
      %p115 = por %p113, %p114
      %p117 = scmp.ne.s32.totalorder %s100, %s116
      %p118 = scmp.eq.s32.totalorder %s28, 0
      %p119 = por %p117, %p118
      %s120 = ssub.s32 %s30, %s37
      %p121 = scmp.eq.s32.totalorder %s120, 0
      %s123 = sadd.s32 %s122, 1
      %s124 = scalar_select %p121, %s122, %s123
      %p127 = pneg %p121
      %p128 = scmp.eq.s32.totalorder %s22, 3
      %p129 = por %p127, %p128
      %p130 = scmp.ne.s32.totalorder %s122, %s125
      %p131 = scmp.eq.s32.totalorder %s22, 0
      %p132 = por %p130, %p131
      %p133 = scmp.ne.s32.totalorder %s122, %s125
      %p134 = scmp.eq.s32.totalorder %s27, 3
      %p135 = por %p133, %p134
      %p136 = scmp.ne.s32.totalorder %s125, %s126
      %p137 = scmp.eq.s32.totalorder %s27, 0
      %p138 = por %p136, %p137
      %p139 = scmp.ne.s32.totalorder %s125, %s126
      %p140 = scmp.eq.s32.totalorder %s28, 3
      %p141 = por %p139, %p140
      %p143 = scmp.ne.s32.totalorder %s126, %s142
      %p144 = scmp.eq.s32.totalorder %s28, 0
      %p145 = por %p143, %p144
      %s147 = sadd.s32 %s146, 1
      %p150 = scmp.eq.s32.totalorder %s22, 3
      %p151 = scmp.ne.s32.totalorder %s146, %s148
      %p152 = scmp.eq.s32.totalorder %s22, 0
      %p153 = por %p151, %p152
      %p154 = scmp.ne.s32.totalorder %s146, %s148
      %p155 = scmp.eq.s32.totalorder %s27, 3
      %p156 = por %p154, %p155
      %p157 = scmp.ne.s32.totalorder %s148, %s149
      %p158 = scmp.eq.s32.totalorder %s27, 0
      %p159 = por %p157, %p158
      %p160 = scmp.ne.s32.totalorder %s148, %s149
      %p161 = scmp.eq.s32.totalorder %s28, 3
      %p162 = por %p160, %p161
      %p164 = scmp.ne.s32.totalorder %s149, %s163
      %p165 = scmp.eq.s32.totalorder %s28, 0
      %p166 = por %p164, %p165
      %s168 = sadd.s32 %s167, 1
      %p171 = scmp.eq.s32.totalorder %s22, 3
      %p172 = scmp.ne.s32.totalorder %s167, %s169
      %p173 = scmp.eq.s32.totalorder %s22, 0
      %p174 = por %p172, %p173
      %p175 = scmp.ne.s32.totalorder %s167, %s169
      %p176 = scmp.eq.s32.totalorder %s27, 3
      %p177 = por %p175, %p176
      %p178 = scmp.ne.s32.totalorder %s169, %s170
      %p179 = scmp.eq.s32.totalorder %s27, 0
      %p180 = por %p178, %p179
      %p181 = scmp.ne.s32.totalorder %s169, %s170
      %p182 = scmp.eq.s32.totalorder %s28, 3
      %p183 = por %p181, %p182
      %p185 = scmp.ne.s32.totalorder %s170, %s184
      %p186 = scmp.eq.s32.totalorder %s28, 0
      %p187 = por %p185, %p186
      %s188 = ssub.s32 %s29, %s41
      %p189 = scmp.eq.s32.totalorder %s188, 0
      %s191 = sadd.s32 %s190, 1
      %s192 = scalar_select %p189, %s190, %s191
      %p195 = pneg %p189
      %p196 = scmp.eq.s32.totalorder %s22, 3
      %p197 = por %p195, %p196
      %p198 = scmp.ne.s32.totalorder %s190, %s193
      %p199 = scmp.eq.s32.totalorder %s22, 0
      %p200 = por %p198, %p199
      %p201 = scmp.ne.s32.totalorder %s190, %s193
      %p202 = scmp.eq.s32.totalorder %s27, 3
      %p203 = por %p201, %p202
      %p204 = scmp.ne.s32.totalorder %s193, %s194
      %p205 = scmp.eq.s32.totalorder %s27, 0
      %p206 = por %p204, %p205
      %p207 = scmp.ne.s32.totalorder %s193, %s194
      %p208 = scmp.eq.s32.totalorder %s28, 3
      %p209 = por %p207, %p208
      %p211 = scmp.ne.s32.totalorder %s194, %s210
      %p212 = scmp.eq.s32.totalorder %s28, 0
      %p213 = por %p211, %p212
      %s214 = ssub.s32 %s29, %s41
      %p215 = scmp.eq.s32.totalorder %s214, 0
      %s217 = sadd.s32 %s216, 1
      %s218 = scalar_select %p215, %s216, %s217
      %p221 = pneg %p215
      %p222 = scmp.eq.s32.totalorder %s22, 3
      %p223 = por %p221, %p222
      %p224 = scmp.ne.s32.totalorder %s216, %s219
      %p225 = scmp.eq.s32.totalorder %s22, 0
      %p226 = por %p224, %p225
      %p227 = scmp.ne.s32.totalorder %s216, %s219
      %p228 = scmp.eq.s32.totalorder %s27, 3
      %p229 = por %p227, %p228
      %p230 = scmp.ne.s32.totalorder %s219, %s220
      %p231 = scmp.eq.s32.totalorder %s27, 0
      %p232 = por %p230, %p231
      %p233 = scmp.ne.s32.totalorder %s219, %s220
      %p234 = scmp.eq.s32.totalorder %s28, 3
      %p235 = por %p233, %p234
      %p237 = scmp.ne.s32.totalorder %s220, %s236
      %p238 = scmp.eq.s32.totalorder %s28, 0
      %p239 = por %p237, %p238
      %p240 = scmp.le.s32.totalorder 1, %s22
      %p241 = scmp.lt.s32.totalorder %s22, 5
      %p242 = pnand %p240, %p241
      %p243 = pneg %p242
      // Predicated region
      $region9: #{tpu_custom_call.1} parent=5 // pred_check
        _
      $region10: #{tpu_custom_call.1} parent=5 // pred_check_branch
        %245 = sbr.rel (%p242) target = $region12
      $region11: #{tpu_custom_call.1} parent=5 // pred_region
        %s246 = ssub.s32 %s22, 1
        // Predicated region
        $region13: #{tpu_custom_call.1} parent=11 // pred_check
          %p247 = pneg %p159
        $region14: #{tpu_custom_call.1} parent=11 // pred_check_branch
          %249 = sbr.rel (%p247) target = $region16
        $region15: #{tpu_custom_call.1} parent=11 // pred_region
          _
        $region16: #{tpu_custom_call.1} parent=11 // pred_fallthru
          _
        // Predicated region
        $region17: #{tpu_custom_call.1} parent=11 // pred_check
          %p250 = pneg %p180
        $region18: #{tpu_custom_call.1} parent=11 // pred_check_branch
          %252 = sbr.rel (%p250) target = $region20
        $region19: #{tpu_custom_call.1} parent=11 // pred_region
          _
        $region20: #{tpu_custom_call.1} parent=11 // pred_fallthru
          _
      $region12: #{tpu_custom_call.1} parent=5 // pred_fallthru
        _
      %p253 = scmp.lt.s32.totalorder %s22, 4
      // Predicated region
      $region21: #{tpu_custom_call.1} parent=5 // pred_check
        %p254 = pneg %p253
      $region22: #{tpu_custom_call.1} parent=5 // pred_check_branch
        %256 = sbr.rel (%p254) target = $region24
      $region23: #{tpu_custom_call.1} parent=5 // pred_region
        // Predicated region
        $region25: #{tpu_custom_call.1} parent=23 // pred_check
          %p257 = pneg %p54
        $region26: #{tpu_custom_call.1} parent=23 // pred_check_branch
          %259 = sbr.rel (%p257) target = $region28
        $region27: #{tpu_custom_call.1} parent=23 // pred_region
          %s260 = smul.u32 2, %s29
          %p261 = scmp.lt.s32.totalorder %s260, 3
          %s262 = scalar_select %p261, %s260, 3
          %s263 = smul.addr %s262, 8
          %s264 = scalar_lea.vmem %s0, %s263
          %s265 = smul.u32 2, %s29
        $region28: #{tpu_custom_call.1} parent=23 // pred_fallthru
          _
        // Predicated region
        $region29: #{tpu_custom_call.1} parent=23 // pred_check
          %p266 = pneg %p80
        $region30: #{tpu_custom_call.1} parent=23 // pred_check_branch
          %268 = sbr.rel (%p266) target = $region32
        $region31: #{tpu_custom_call.1} parent=23 // pred_region
          %s269 = sand.u32 %s70, 1
          %s270 = scalar_lea.sflag [#allocation4], %s269
          %s271 = sand.u32 %s70, 1
          %s272 = smul.addr %s271, 128
          %s273 = scalar_lea.vmem [#allocation3], %s272
          %s275 = ssub.s32 2048, 2048
          %276 = vsyncadd %s270, %s275
          %s277 = smul.addr %s30, 128
          %s278 = scalar_lea.hbm %s1, %s277
          %s279 = sshll.u32 %s273, 4
          %s280 = int_to_ptr.vmem [resolvable:$true] %s279
          %285 = dma.hbm_to_vmem [thread:$0]  %s278, 2048, %s280, %s270, 256, 128, 8
        $region32: #{tpu_custom_call.1} parent=23 // pred_fallthru
          _
        // Predicated region
        $region33: #{tpu_custom_call.1} parent=23 // pred_check
          %p286 = pneg %p106
        $region34: #{tpu_custom_call.1} parent=23 // pred_check_branch
          %288 = sbr.rel (%p286) target = $region36
        $region35: #{tpu_custom_call.1} parent=23 // pred_region
          %s289 = sand.u32 %s22, 1
          %s290 = scalar_lea.sflag [#allocation7], %s289
          %s291 = sand.u32 %s96, 1
          %s292 = smul.addr %s291, 128
          %s293 = scalar_lea.vmem [#allocation6], %s292
          %s295 = ssub.s32 2048, 2048
          %296 = vsyncadd %s290, %s295
          %s297 = smul.addr %s30, 128
          %s298 = scalar_lea.hbm %s2, %s297
          %s299 = sshll.u32 %s293, 4
          %s300 = int_to_ptr.vmem [resolvable:$true] %s299
          %305 = dma.hbm_to_vmem [thread:$0]  %s298, 2048, %s300, %s290, 256, 128, 8
        $region36: #{tpu_custom_call.1} parent=23 // pred_fallthru
          _
        // Predicated region
        $region37: #{tpu_custom_call.1} parent=23 // pred_check
          %p306 = pneg %p132
        $region38: #{tpu_custom_call.1} parent=23 // pred_check_branch
          %308 = sbr.rel (%p306) target = $region40
        $region39: #{tpu_custom_call.1} parent=23 // pred_region
          %s309 = sand.u32 %s22, 1
          %s310 = scalar_lea.sflag [#allocation7], %s309
          %s311 = sand.u32 %s122, 1
          %s312 = smul.addr %s311, 128
          %s313 = scalar_lea.vmem [#allocation8], %s312
          %s314 = smul.u32 16, %s30
          %s316 = ssub.s32 2048, 2048
          %317 = vsyncadd %s310, %s316
          %s318 = smul.addr %s314, 128
          %s319 = scalar_lea.hbm %s3, %s318
          %s320 = sshll.u32 %s313, 4
          %s321 = int_to_ptr.vmem [resolvable:$true] %s320
          %326 = dma.hbm_to_vmem [thread:$0]  %s319, 2048, %s321, %s310, 128, 128, 8
        $region40: #{tpu_custom_call.1} parent=23 // pred_fallthru
          _
        // Predicated region
        $region41: #{tpu_custom_call.1} parent=23 // pred_check
          %p327 = pneg %p200
        $region42: #{tpu_custom_call.1} parent=23 // pred_check_branch
          %329 = sbr.rel (%p327) target = $region44
        $region43: #{tpu_custom_call.1} parent=23 // pred_region
          %s330 = smul.u32 2, %s29
          %p331 = scmp.lt.s32.totalorder %s330, 3
          %s332 = scalar_select %p331, %s330, 3
          %s333 = smul.addr %s332, 8
          %s334 = scalar_lea.vmem %s6, %s333
          %s335 = smul.u32 2, %s29
        $region44: #{tpu_custom_call.1} parent=23 // pred_fallthru
          _
      $region24: #{tpu_custom_call.1} parent=5 // pred_fallthru
        _
      %p336 = scmp.le.s32.totalorder 1, %s22
      %p337 = scmp.lt.s32.totalorder %s22, 5
      %p338 = pnand %p336, %p337
      %p339 = pneg %p338
      // Predicated region
      $region45: #{tpu_custom_call.1} parent=5 // pred_check
        _
      $region46: #{tpu_custom_call.1} parent=5 // pred_check_branch
        %341 = sbr.rel (%p338) target = $region48
      $region47: #{tpu_custom_call.1} parent=5 // pred_region
        %s342 = ssub.s32 %s22, 1
        %s343 = sand.u32 %s73, 1
        %s344 = scalar_lea.sflag [#allocation4], %s343
        %s345 = sand.u32 %s73, 1
        %s346 = smul.addr %s345, 128
        %s347 = scalar_lea.vmem [#allocation3], %s346
        // Predicated region
        $region49: #{tpu_custom_call.1} parent=47 // pred_check
          %p348 = pneg %p86
        $region50: #{tpu_custom_call.1} parent=47 // pred_check_branch
          %350 = sbr.rel (%p348) target = $region52
        $region51: #{tpu_custom_call.1} parent=47 // pred_region
          %351 = dma.done %s344, 2048
        $region52: #{tpu_custom_call.1} parent=47 // pred_fallthru
          _
        %s352 = sand.u32 %s27, 1
        %s353 = scalar_lea.sflag [#allocation7], %s352
        %s354 = sand.u32 %s99, 1
        %s355 = smul.addr %s354, 128
        %s356 = scalar_lea.vmem [#allocation6], %s355
        // Predicated region
        $region53: #{tpu_custom_call.1} parent=47 // pred_check
          %p357 = pneg %p112
        $region54: #{tpu_custom_call.1} parent=47 // pred_check_branch
          %359 = sbr.rel (%p357) target = $region56
        $region55: #{tpu_custom_call.1} parent=47 // pred_region
          %360 = dma.done %s353, 2048
        $region56: #{tpu_custom_call.1} parent=47 // pred_fallthru
          _
        %s361 = sand.u32 %s27, 1
        %s362 = scalar_lea.sflag [#allocation7], %s361
        %s363 = sand.u32 %s125, 1
        %s364 = smul.addr %s363, 128
        %s365 = scalar_lea.vmem [#allocation8], %s364
        // Predicated region
        $region57: #{tpu_custom_call.1} parent=47 // pred_check
          %p366 = pneg %p138
        $region58: #{tpu_custom_call.1} parent=47 // pred_check_branch
          %368 = sbr.rel (%p366) target = $region60
        $region59: #{tpu_custom_call.1} parent=47 // pred_region
          %369 = dma.done %s362, 2048
        $region60: #{tpu_custom_call.1} parent=47 // pred_fallthru
          _
        %s370 = smul.u32 2, %s31
        %p371 = scmp.lt.s32.totalorder %s370, 3
        %s372 = scalar_select %p371, %s370, 3
        %s373 = smul.addr %s372, 8
        %s374 = scalar_lea.vmem %s0, %s373
        %p375 = pneg %p60
        %p376 = pneg %p57
        %s377 = sand.u32 %s73, 1
        %s378 = scalar_lea.sflag [#allocation4], %s377
        %s379 = sand.u32 %s73, 1
        %s380 = smul.addr %s379, 128
        %s381 = scalar_lea.vmem [#allocation3], %s380
        %p382 = pneg %p86
        %p383 = pneg %p83
        %s384 = sand.u32 %s27, 1
        %s385 = scalar_lea.sflag [#allocation7], %s384
        %s386 = sand.u32 %s99, 1
        %s387 = smul.addr %s386, 128
        %s388 = scalar_lea.vmem [#allocation6], %s387
        %p389 = pneg %p112
        %p390 = pneg %p109
        %s391 = sand.u32 %s27, 1
        %s392 = scalar_lea.sflag [#allocation7], %s391
        %s393 = sand.u32 %s125, 1
        %s394 = smul.addr %s393, 128
        %s395 = scalar_lea.vmem [#allocation8], %s394
        %p396 = pneg %p138
        %p397 = pneg %p135
        %p398 = pneg %p159
        %p399 = pneg %p156
        %p400 = pneg %p180
        %p401 = pneg %p177
        %s402 = smul.u32 2, %s31
        %p403 = scmp.lt.s32.totalorder %s402, 3
        %s404 = scalar_select %p403, %s402, 3
        %s405 = smul.addr %s404, 8
        %s406 = scalar_lea.vmem %s6, %s405
        %p407 = pneg %p206
        %p408 = pneg %p203
        %p409 = pneg %p232
        %p410 = pneg %p229
        %s411 = sand.u32 %s219, 1
        %s412 = scalar_lea.sflag [#allocation5], %s411
        %s413 = sand.u32 %s219, 1
        %s414 = smul.addr %s413, 16
        %s415 = scalar_lea.vmem [#allocation9], %s414
        %s416 = smul.u32 2, %s31
        %p417 = scmp.lt.s32.totalorder %s416, 3
        %s418 = scalar_select %p417, %s416, 3
        %s419 = smul.addr %s418, 8
        %s420 = scalar_lea.vmem %s0, %s419
        %s421 = smul.u32 2, %s31
        %s422 = smul.u32 16, %s32
        %s423 = smul.u32 2, %s31
        %p424 = scmp.lt.s32.totalorder %s423, 3
        %s425 = scalar_select %p424, %s423, 3
        %s426 = smul.addr %s425, 8
        %s427 = scalar_lea.vmem %s6, %s426
        %s428 = smul.u32 2, %s31
        %s429 = smul.u32 2, %s31
        %v430 = vld [vmem:[%s420] sm:$0xff]
        %v431 = vld [vmem:[%s420 + $0x8] sm:$0xff]
        %p432 = scmp.eq.s32.totalorder %s32, 0
        // Predicated region
        $region61: #{tpu_custom_call.1} parent=47 // pred_check
          %p433 = pneg %p432
        $region62: #{tpu_custom_call.1} parent=47 // pred_check_branch
          %435 = sbr.rel (%p433) target = $region64
        $region63: #{tpu_custom_call.1} parent=47 // pred_region
          %v436 = vld [vmem:[%s4] sm:$0xff]
          %v437 = vld [vmem:[%s4 + $0x8] sm:$0xff]
          %v438 = vld [vmem:[%s4 + $0x10] sm:$0xff]
          %v439 = vld [vmem:[%s4 + $0x18] sm:$0xff]
          %v440 = vld [vmem:[%s4 + $0x20] sm:$0xff]
          %v441 = vld [vmem:[%s4 + $0x28] sm:$0xff]
          %v442 = vld [vmem:[%s4 + $0x30] sm:$0xff]
          %v443 = vld [vmem:[%s4 + $0x38] sm:$0xff]
          %v444 = vld [vmem:[%s4 + $0x40] sm:$0xff]
          %v445 = vld [vmem:[%s4 + $0x48] sm:$0xff]
          %v446 = vld [vmem:[%s4 + $0x50] sm:$0xff]
          %v447 = vld [vmem:[%s4 + $0x58] sm:$0xff]
          %v448 = vld [vmem:[%s4 + $0x60] sm:$0xff]
          %v449 = vld [vmem:[%s4 + $0x68] sm:$0xff]
          %v450 = vld [vmem:[%s4 + $0x70] sm:$0xff]
          %v451 = vld [vmem:[%s4 + $0x78] sm:$0xff]
          %452 = vmatprep.subr.mxu0 0.0
          %453 = vmatpush1.msra.mxu0 %v436
          %454 = vmatprep.subr.mxu0 0.0
          %455 = vmatpush1.msra.mxu0 %v437
          %456 = vmatprep.subr.mxu0 0.0
          %457 = vmatpush1.msra.mxu0 %v438
          %458 = vmatprep.subr.mxu0 0.0
          %459 = vmatpush1.msra.mxu0 %v439
          %460 = vmatprep.subr.mxu0 0.0
          %461 = vmatpush1.msra.mxu0 %v440
          %462 = vmatprep.subr.mxu0 0.0
          %463 = vmatpush1.msra.mxu0 %v441
          %464 = vmatprep.subr.mxu0 0.0
          %465 = vmatpush1.msra.mxu0 %v442
          %466 = vmatprep.subr.mxu0 0.0
          %467 = vmatpush1.msra.mxu0 %v443
          %468 = vmatprep.subr.mxu0 0.0
          %469 = vmatpush1.msra.mxu0 %v444
          %470 = vmatprep.subr.mxu0 0.0
          %471 = vmatpush1.msra.mxu0 %v445
          %472 = vmatprep.subr.mxu0 0.0
          %473 = vmatpush1.msra.mxu0 %v446
          %474 = vmatprep.subr.mxu0 0.0
          %475 = vmatpush1.msra.mxu0 %v447
          %476 = vmatprep.subr.mxu0 0.0
          %477 = vmatpush1.msra.mxu0 %v448
          %478 = vmatprep.subr.mxu0 0.0
          %479 = vmatpush1.msra.mxu0 %v449
          %480 = vmatprep.subr.mxu0 0.0
          %481 = vmatpush1.msra.mxu0 %v450
          %482 = vmatprep.subr.mxu0 0.0
          %483 = vmatpush1.msra.mxu0 %v451
          %484 = vmatprep.subr.mxu0 0.0
          %485 = vmatpush1.msra.mxu0 0.0
          %486 = vmatprep.subr.mxu0 0.0
          %487 = vmatpush1.msra.mxu0 0.0
          %488 = vmatprep.subr.mxu0 0.0
          %489 = vmatpush1.msra.mxu0 0.0
          %490 = vmatprep.subr.mxu0 0.0
          %491 = vmatpush1.msra.mxu0 0.0
          %492 = vmatprep.subr.mxu0 0.0
          %493 = vmatpush1.msra.mxu0 0.0
          %494 = vmatprep.subr.mxu0 0.0
          %495 = vmatpush1.msra.mxu0 0.0
          %496 = vmatprep.subr.mxu0 0.0
          %497 = vmatpush1.msra.mxu0 0.0
          %498 = vmatprep.subr.mxu0 0.0
          %499 = vmatpush1.msra.mxu0 0.0
          %500 = vmatprep.subr.mxu0 0.0
          %501 = vmatpush1.msra.mxu0 0.0
          %502 = vmatprep.subr.mxu0 0.0
          %503 = vmatpush1.msra.mxu0 0.0
          %504 = vmatprep.subr.mxu0 0.0
          %505 = vmatpush1.msra.mxu0 0.0
          %506 = vmatprep.subr.mxu0 0.0
          %507 = vmatpush1.msra.mxu0 0.0
          %508 = vmatprep.subr.mxu0 0.0
          %509 = vmatpush1.msra.mxu0 0.0
          %510 = vmatprep.subr.mxu0 0.0
          %511 = vmatpush1.msra.mxu0 0.0
          %512 = vmatprep.subr.mxu0 0.0
          %513 = vmatpush1.msra.mxu0 0.0
          %514 = vmatprep.subr.mxu0 0.0
          %515 = vmatpush1.msra.mxu0 0.0
          %516 = vmatprep.mubr.f32.mxu0 0.0
          %517 = vmatmul.mubr.f32.gmra.mrb[0].mxu0 %v430
          %v518 = vpop.f32.mrb[0].mxu0
          %v519 = vadd.f32 0.0, %v518
          %v520 = vpop.f32.mrb[0].mxu0
          %521 = vmatprep.mubr.f32.mxu0 0.0
          %522 = vmatmul.mubr.f32.gmra.mrb[0].mxu0 %v431
          %v523 = vpop.f32.mrb[0].mxu0
          %v524 = vadd.f32 0.0, %v523
          %v525 = vpop.f32.mrb[0].mxu0
          %526 = vdwg.mxu0
          %v527 = vld [vmem:[%s5] sm:$0xff]
          %vm528 = vcmask 64512
          %v530 = vsel %vm528, %v519, 0
          %v533 = vsel %vm528, %v524, 0
          %535 = vmatprep.subr.mxu0 0.0
          %536 = vmatpush1.msra.mxu0 %v527
          %537 = vmatprep.subr.mxu0 0.0
          %538 = vmatpush1.msra.mxu0 0.0
          %539 = vmatprep.subr.mxu0 0.0
          %540 = vmatpush1.msra.mxu0 0.0
          %541 = vmatprep.subr.mxu0 0.0
          %542 = vmatpush1.msra.mxu0 0.0
          %543 = vmatprep.subr.mxu0 0.0
          %544 = vmatpush1.msra.mxu0 0.0
          %545 = vmatprep.subr.mxu0 0.0
          %546 = vmatpush1.msra.mxu0 0.0
          %547 = vmatprep.subr.mxu0 0.0
          %548 = vmatpush1.msra.mxu0 0.0
          %549 = vmatprep.subr.mxu0 0.0
          %550 = vmatpush1.msra.mxu0 0.0
          %551 = vmatprep.subr.mxu0 0.0
          %552 = vmatpush1.msra.mxu0 0.0
          %553 = vmatprep.subr.mxu0 0.0
          %554 = vmatpush1.msra.mxu0 0.0
          %555 = vmatprep.subr.mxu0 0.0
          %556 = vmatpush1.msra.mxu0 0.0
          %557 = vmatprep.subr.mxu0 0.0
          %558 = vmatpush1.msra.mxu0 0.0
          %559 = vmatprep.subr.mxu0 0.0
          %560 = vmatpush1.msra.mxu0 0.0
          %561 = vmatprep.subr.mxu0 0.0
          %562 = vmatpush1.msra.mxu0 0.0
          %563 = vmatprep.subr.mxu0 0.0
          %564 = vmatpush1.msra.mxu0 0.0
          %565 = vmatprep.subr.mxu0 0.0
          %566 = vmatpush1.msra.mxu0 0.0
          %567 = vmatprep.subr.mxu0 0.0
          %568 = vmatpush1.msra.mxu0 0.0
          %569 = vmatprep.subr.mxu0 0.0
          %570 = vmatpush1.msra.mxu0 0.0
          %571 = vmatprep.subr.mxu0 0.0
          %572 = vmatpush1.msra.mxu0 0.0
          %573 = vmatprep.subr.mxu0 0.0
          %574 = vmatpush1.msra.mxu0 0.0
          %575 = vmatprep.subr.mxu0 0.0
          %576 = vmatpush1.msra.mxu0 0.0
          %577 = vmatprep.subr.mxu0 0.0
          %578 = vmatpush1.msra.mxu0 0.0
          %579 = vmatprep.subr.mxu0 0.0
          %580 = vmatpush1.msra.mxu0 0.0
          %581 = vmatprep.subr.mxu0 0.0
          %582 = vmatpush1.msra.mxu0 0.0
          %583 = vmatprep.subr.mxu0 0.0
          %584 = vmatpush1.msra.mxu0 0.0
          %585 = vmatprep.subr.mxu0 0.0
          %586 = vmatpush1.msra.mxu0 0.0
          %587 = vmatprep.subr.mxu0 0.0
          %588 = vmatpush1.msra.mxu0 0.0
          %589 = vmatprep.subr.mxu0 0.0
          %590 = vmatpush1.msra.mxu0 0.0
          %591 = vmatprep.subr.mxu0 0.0
          %592 = vmatpush1.msra.mxu0 0.0
          %593 = vmatprep.subr.mxu0 0.0
          %594 = vmatpush1.msra.mxu0 0.0
          %595 = vmatprep.subr.mxu0 0.0
          %596 = vmatpush1.msra.mxu0 0.0
          %597 = vmatprep.subr.mxu0 0.0
          %598 = vmatpush1.msra.mxu0 0.0
          %599 = vmatprep.mubr.f32.mxu0 0.0
          %600 = vmatmul.mubr.f32.gmra.mrb[0].mxu0 %v530
          %v601 = vpop.f32.mrb[0].mxu0
          %v602 = vadd.f32 0.0, %v601
          %v603 = vpop.f32.mrb[0].mxu0
          %604 = vmatprep.mubr.f32.mxu0 0.0
          %605 = vmatmul.mubr.f32.gmra.mrb[0].mxu0 %v533
          %v606 = vpop.f32.mrb[0].mxu0
          %v607 = vadd.f32 0.0, %v606
          %v608 = vpop.f32.mrb[0].mxu0
          %609 = vdwg.mxu0
          %v610 = vmul.f32 %v602, 8.888889
          %v611 = vmul.f32 %v607, 8.888889
          %v612 = vld [vmem:[%s427] sm:$0xff]
          %v613 = vld [vmem:[%s427 + $0x8] sm:$0xff]
          %v614 = vmul.f32 %v610, %v612
          %v615 = vmul.f32 %v611, %v613
          %616 = vst [vmem:[#allocation2] sm:$0xff] %v614
          %617 = vst [vmem:[#allocation2 + $0x8] sm:$0xff] %v615
        $region64: #{tpu_custom_call.1} parent=47 // pred_fallthru
          _
        %v618 = vld [vmem:[%s347] sm:$0xff]
        %v619 = vld [vmem:[%s347 + $0x8] sm:$0xff]
        %v620 = vld [vmem:[%s347 + $0x10] sm:$0xff]
        %v621 = vld [vmem:[%s347 + $0x18] sm:$0xff]
        %v622 = vld [vmem:[%s347 + $0x20] sm:$0xff]
        %v623 = vld [vmem:[%s347 + $0x28] sm:$0xff]
        %v624 = vld [vmem:[%s347 + $0x30] sm:$0xff]
        %v625 = vld [vmem:[%s347 + $0x38] sm:$0xff]
        %v626 = vld [vmem:[%s347 + $0x40] sm:$0xff]
        %v627 = vld [vmem:[%s347 + $0x48] sm:$0xff]
        %v628 = vld [vmem:[%s347 + $0x50] sm:$0xff]
        %v629 = vld [vmem:[%s347 + $0x58] sm:$0xff]
        %v630 = vld [vmem:[%s347 + $0x60] sm:$0xff]
        %v631 = vld [vmem:[%s347 + $0x68] sm:$0xff]
        %v632 = vld [vmem:[%s347 + $0x70] sm:$0xff]
        %v633 = vld [vmem:[%s347 + $0x78] sm:$0xff]
        %634 = vmatprep.subr.mxu0 0.0
        %635 = vmatpush1.msra.mxu0 %v618
        %636 = vmatprep.subr.mxu0 0.0
        %637 = vmatpush1.msra.mxu0 %v619
        %638 = vmatprep.subr.mxu0 0.0
        %639 = vmatpush1.msra.mxu0 %v620
        %640 = vmatprep.subr.mxu0 0.0
        %641 = vmatpush1.msra.mxu0 %v621
        %642 = vmatprep.subr.mxu0 0.0
        %643 = vmatpush1.msra.mxu0 %v622
        %644 = vmatprep.subr.mxu0 0.0
        %645 = vmatpush1.msra.mxu0 %v623
        %646 = vmatprep.subr.mxu0 0.0
        %647 = vmatpush1.msra.mxu0 %v624
        %648 = vmatprep.subr.mxu0 0.0
        %649 = vmatpush1.msra.mxu0 %v625
        %650 = vmatprep.subr.mxu0 0.0
        %651 = vmatpush1.msra.mxu0 %v626
        %652 = vmatprep.subr.mxu0 0.0
        %653 = vmatpush1.msra.mxu0 %v627
        %654 = vmatprep.subr.mxu0 0.0
        %655 = vmatpush1.msra.mxu0 %v628
        %656 = vmatprep.subr.mxu0 0.0
        %657 = vmatpush1.msra.mxu0 %v629
        %658 = vmatprep.subr.mxu0 0.0
        %659 = vmatpush1.msra.mxu0 %v630
        %660 = vmatprep.subr.mxu0 0.0
        %661 = vmatpush1.msra.mxu0 %v631
        %662 = vmatprep.subr.mxu0 0.0
        %663 = vmatpush1.msra.mxu0 %v632
        %664 = vmatprep.subr.mxu0 0.0
        %665 = vmatpush1.msra.mxu0 %v633
        %666 = vmatprep.subr.mxu0 0.0
        %667 = vmatpush1.msra.mxu0 0.0
        %668 = vmatprep.subr.mxu0 0.0
        %669 = vmatpush1.msra.mxu0 0.0
        %670 = vmatprep.subr.mxu0 0.0
        %671 = vmatpush1.msra.mxu0 0.0
        %672 = vmatprep.subr.mxu0 0.0
        %673 = vmatpush1.msra.mxu0 0.0
        %674 = vmatprep.subr.mxu0 0.0
        %675 = vmatpush1.msra.mxu0 0.0
        %676 = vmatprep.subr.mxu0 0.0
        %677 = vmatpush1.msra.mxu0 0.0
        %678 = vmatprep.subr.mxu0 0.0
        %679 = vmatpush1.msra.mxu0 0.0
        %680 = vmatprep.subr.mxu0 0.0
        %681 = vmatpush1.msra.mxu0 0.0
        %682 = vmatprep.subr.mxu0 0.0
        %683 = vmatpush1.msra.mxu0 0.0
        %684 = vmatprep.subr.mxu0 0.0
        %685 = vmatpush1.msra.mxu0 0.0
        %686 = vmatprep.subr.mxu0 0.0
        %687 = vmatpush1.msra.mxu0 0.0
        %688 = vmatprep.subr.mxu0 0.0
        %689 = vmatpush1.msra.mxu0 0.0
        %690 = vmatprep.subr.mxu0 0.0
        %691 = vmatpush1.msra.mxu0 0.0
        %692 = vmatprep.subr.mxu0 0.0
        %693 = vmatpush1.msra.mxu0 0.0
        %694 = vmatprep.subr.mxu0 0.0
        %695 = vmatpush1.msra.mxu0 0.0
        %696 = vmatprep.subr.mxu0 0.0
        %697 = vmatpush1.msra.mxu0 0.0
        %698 = vmatprep.mubr.f32.mxu0 0.0
        %699 = vmatmul.mubr.f32.gmra.mrb[0].mxu0 %v430
        %v700 = vpop.f32.mrb[0].mxu0
        %v701 = vadd.f32 0.0, %v700
        %v702 = vpop.f32.mrb[0].mxu0
        %703 = vmatprep.mubr.f32.mxu0 0.0
        %704 = vmatmul.mubr.f32.gmra.mrb[0].mxu0 %v431
        %v705 = vpop.f32.mrb[0].mxu0
        %v706 = vadd.f32 0.0, %v705
        %v707 = vpop.f32.mrb[0].mxu0
        %708 = vdwg.mxu0
        %v709 = vld [vmem:[%s356] sm:$0xff]
        %v710 = vld [vmem:[%s356 + $0x8] sm:$0xff]
        %v711 = vld [vmem:[%s356 + $0x10] sm:$0xff]
        %v712 = vld [vmem:[%s356 + $0x18] sm:$0xff]
        %v713 = vld [vmem:[%s356 + $0x20] sm:$0xff]
        %v714 = vld [vmem:[%s356 + $0x28] sm:$0xff]
        %v715 = vld [vmem:[%s356 + $0x30] sm:$0xff]
        %v716 = vld [vmem:[%s356 + $0x38] sm:$0xff]
        %v717 = vld [vmem:[%s356 + $0x40] sm:$0xff]
        %v718 = vld [vmem:[%s356 + $0x48] sm:$0xff]
        %v719 = vld [vmem:[%s356 + $0x50] sm:$0xff]
        %v720 = vld [vmem:[%s356 + $0x58] sm:$0xff]
        %v721 = vld [vmem:[%s356 + $0x60] sm:$0xff]
        %v722 = vld [vmem:[%s356 + $0x68] sm:$0xff]
        %v723 = vld [vmem:[%s356 + $0x70] sm:$0xff]
        %v724 = vld [vmem:[%s356 + $0x78] sm:$0xff]
        %725 = vmatprep.subr.mxu0 0.0
        %726 = vmatpush1.msra.mxu0 %v709
        %727 = vmatprep.subr.mxu0 0.0
        %728 = vmatpush1.msra.mxu0 %v710
        %729 = vmatprep.subr.mxu0 0.0
        %730 = vmatpush1.msra.mxu0 %v711
        %731 = vmatprep.subr.mxu0 0.0
        %732 = vmatpush1.msra.mxu0 %v712
        %733 = vmatprep.subr.mxu0 0.0
        %734 = vmatpush1.msra.mxu0 %v713
        %735 = vmatprep.subr.mxu0 0.0
        %736 = vmatpush1.msra.mxu0 %v714
        %737 = vmatprep.subr.mxu0 0.0
        %738 = vmatpush1.msra.mxu0 %v715
        %739 = vmatprep.subr.mxu0 0.0
        %740 = vmatpush1.msra.mxu0 %v716
        %741 = vmatprep.subr.mxu0 0.0
        %742 = vmatpush1.msra.mxu0 %v717
        %743 = vmatprep.subr.mxu0 0.0
        %744 = vmatpush1.msra.mxu0 %v718
        %745 = vmatprep.subr.mxu0 0.0
        %746 = vmatpush1.msra.mxu0 %v719
        %747 = vmatprep.subr.mxu0 0.0
        %748 = vmatpush1.msra.mxu0 %v720
        %749 = vmatprep.subr.mxu0 0.0
        %750 = vmatpush1.msra.mxu0 %v721
        %751 = vmatprep.subr.mxu0 0.0
        %752 = vmatpush1.msra.mxu0 %v722
        %753 = vmatprep.subr.mxu0 0.0
        %754 = vmatpush1.msra.mxu0 %v723
        %755 = vmatprep.subr.mxu0 0.0
        %756 = vmatpush1.msra.mxu0 %v724
        %757 = vmatprep.subr.mxu0 0.0
        %758 = vmatpush1.msra.mxu0 0.0
        %759 = vmatprep.subr.mxu0 0.0
        %760 = vmatpush1.msra.mxu0 0.0
        %761 = vmatprep.subr.mxu0 0.0
        %762 = vmatpush1.msra.mxu0 0.0
        %763 = vmatprep.subr.mxu0 0.0
        %764 = vmatpush1.msra.mxu0 0.0
        %765 = vmatprep.subr.mxu0 0.0
        %766 = vmatpush1.msra.mxu0 0.0
        %767 = vmatprep.subr.mxu0 0.0
        %768 = vmatpush1.msra.mxu0 0.0
        %769 = vmatprep.subr.mxu0 0.0
        %770 = vmatpush1.msra.mxu0 0.0
        %771 = vmatprep.subr.mxu0 0.0
        %772 = vmatpush1.msra.mxu0 0.0
        %773 = vmatprep.subr.mxu0 0.0
        %774 = vmatpush1.msra.mxu0 0.0
        %775 = vmatprep.subr.mxu0 0.0
        %776 = vmatpush1.msra.mxu0 0.0
        %777 = vmatprep.subr.mxu0 0.0
        %778 = vmatpush1.msra.mxu0 0.0
        %779 = vmatprep.subr.mxu0 0.0
        %780 = vmatpush1.msra.mxu0 0.0
        %781 = vmatprep.subr.mxu0 0.0
        %782 = vmatpush1.msra.mxu0 0.0
        %783 = vmatprep.subr.mxu0 0.0
        %784 = vmatpush1.msra.mxu0 0.0
        %785 = vmatprep.subr.mxu0 0.0
        %786 = vmatpush1.msra.mxu0 0.0
        %787 = vmatprep.subr.mxu0 0.0
        %788 = vmatpush1.msra.mxu0 0.0
        %789 = vmatprep.mubr.f32.mxu0 0.0
        %790 = vmatmul.mubr.f32.gmra.mrb[0].mxu0 %v430
        %v791 = vpop.f32.mrb[0].mxu0
        %v792 = vadd.f32 0.0, %v791
        %v793 = vpop.f32.mrb[0].mxu0
        %794 = vmatprep.mubr.f32.mxu0 0.0
        %795 = vmatmul.mubr.f32.gmra.mrb[0].mxu0 %v431
        %v796 = vpop.f32.mrb[0].mxu0
        %v797 = vadd.f32 0.0, %v796
        %v798 = vpop.f32.mrb[0].mxu0
        %799 = vdwg.mxu0
        %v800 = vxor.u32 %v701, 2147483648
        %v801 = vxor.u32 %v706, 2147483648
        %v802 = vmul.f32 %v800, 1.442695
        %v803 = vpow.pop %v802
        %v804 = vmul.f32 %v801, 1.442695
        %v805 = vpow.pop %v804
        %v806 = vadd.f32 %v803, 1.0
        %v807 = vadd.f32 %v805, 1.0
        %v808 = vrcp.pop %v806
        %v809 = vmul.f32 1.0, %v808
        %v810 = vrcp.pop %v807
        %v811 = vmul.f32 1.0, %v810
        %v812 = vmul.f32 %v701, %v809
        %v813 = vmul.f32 %v706, %v811
        %v814 = vmul.f32 %v812, %v792
        %v815 = vmul.f32 %v813, %v797
        %v816 = vld [vmem:[#allocation2] sm:$0xff]
        %v817 = vld [vmem:[#allocation2 + $0x8] sm:$0xff]
        %v818 = vld [vmem:[%s365] sm:$0xff]
        %v819 = vld [vmem:[%s365 + $0x8] sm:$0xff]
        %v820 = vld [vmem:[%s365 + $0x10] sm:$0xff]
        %v821 = vld [vmem:[%s365 + $0x18] sm:$0xff]
        %v822 = vld [vmem:[%s365 + $0x20] sm:$0xff]
        %v823 = vld [vmem:[%s365 + $0x28] sm:$0xff]
        %v824 = vld [vmem:[%s365 + $0x30] sm:$0xff]
        %v825 = vld [vmem:[%s365 + $0x38] sm:$0xff]
        %v826 = vld [vmem:[%s365 + $0x40] sm:$0xff]
        %v827 = vld [vmem:[%s365 + $0x48] sm:$0xff]
        %v828 = vld [vmem:[%s365 + $0x50] sm:$0xff]
        %v829 = vld [vmem:[%s365 + $0x58] sm:$0xff]
        %v830 = vld [vmem:[%s365 + $0x60] sm:$0xff]
        %v831 = vld [vmem:[%s365 + $0x68] sm:$0xff]
        %v832 = vld [vmem:[%s365 + $0x70] sm:$0xff]
        %v833 = vld [vmem:[%s365 + $0x78] sm:$0xff]
        %834 = vmatprep.subr.mxu0 0.0
        %835 = vmatpush1.msra.mxu0 %v818
        %836 = vmatprep.subr.mxu0 0.0
        %837 = vmatpush1.msra.mxu0 %v819
        %838 = vmatprep.subr.mxu0 0.0
        %839 = vmatpush1.msra.mxu0 %v820
        %840 = vmatprep.subr.mxu0 0.0
        %841 = vmatpush1.msra.mxu0 %v821
        %842 = vmatprep.subr.mxu0 0.0
        %843 = vmatpush1.msra.mxu0 %v822
        %844 = vmatprep.subr.mxu0 0.0
        %845 = vmatpush1.msra.mxu0 %v823
        %846 = vmatprep.subr.mxu0 0.0
        %847 = vmatpush1.msra.mxu0 %v824
        %848 = vmatprep.subr.mxu0 0.0
        %849 = vmatpush1.msra.mxu0 %v825
        %850 = vmatprep.subr.mxu0 0.0
        %851 = vmatpush1.msra.mxu0 %v826
        %852 = vmatprep.subr.mxu0 0.0
        %853 = vmatpush1.msra.mxu0 %v827
        %854 = vmatprep.subr.mxu0 0.0
        %855 = vmatpush1.msra.mxu0 %v828
        %856 = vmatprep.subr.mxu0 0.0
        %857 = vmatpush1.msra.mxu0 %v829
        %858 = vmatprep.subr.mxu0 0.0
        %859 = vmatpush1.msra.mxu0 %v830
        %860 = vmatprep.subr.mxu0 0.0
        %861 = vmatpush1.msra.mxu0 %v831
        %862 = vmatprep.subr.mxu0 0.0
        %863 = vmatpush1.msra.mxu0 %v832
        %864 = vmatprep.subr.mxu0 0.0
        %865 = vmatpush1.msra.mxu0 %v833
        %866 = vmatprep.subr.mxu0 0.0
        %867 = vmatpush1.msra.mxu0 0.0
        %868 = vmatprep.subr.mxu0 0.0
        %869 = vmatpush1.msra.mxu0 0.0
        %870 = vmatprep.subr.mxu0 0.0
        %871 = vmatpush1.msra.mxu0 0.0
        %872 = vmatprep.subr.mxu0 0.0
        %873 = vmatpush1.msra.mxu0 0.0
        %874 = vmatprep.subr.mxu0 0.0
        %875 = vmatpush1.msra.mxu0 0.0
        %876 = vmatprep.subr.mxu0 0.0
        %877 = vmatpush1.msra.mxu0 0.0
        %878 = vmatprep.subr.mxu0 0.0
        %879 = vmatpush1.msra.mxu0 0.0
        %880 = vmatprep.subr.mxu0 0.0
        %881 = vmatpush1.msra.mxu0 0.0
        %882 = vmatprep.subr.mxu0 0.0
        %883 = vmatpush1.msra.mxu0 0.0
        %884 = vmatprep.subr.mxu0 0.0
        %885 = vmatpush1.msra.mxu0 0.0
        %886 = vmatprep.subr.mxu0 0.0
        %887 = vmatpush1.msra.mxu0 0.0
        %888 = vmatprep.subr.mxu0 0.0
        %889 = vmatpush1.msra.mxu0 0.0
        %890 = vmatprep.subr.mxu0 0.0
        %891 = vmatpush1.msra.mxu0 0.0
        %892 = vmatprep.subr.mxu0 0.0
        %893 = vmatpush1.msra.mxu0 0.0
        %894 = vmatprep.subr.mxu0 0.0
        %895 = vmatpush1.msra.mxu0 0.0
        %896 = vmatprep.subr.mxu0 0.0
        %897 = vmatpush1.msra.mxu0 0.0
        %898 = vmatprep.mubr.f32.mxu0 0.0
        %899 = vmatmul.mubr.f32.gmra.mrb[0].mxu0 %v814
        %v900 = vpop.f32.mrb[0].mxu0
        %v901 = vadd.f32 0.0, %v900
        %v902 = vpop.f32.mrb[0].mxu0
        %903 = vmatprep.mubr.f32.mxu0 0.0
        %904 = vmatmul.mubr.f32.gmra.mrb[0].mxu0 %v815
        %v905 = vpop.f32.mrb[0].mxu0
        %v906 = vadd.f32 0.0, %v905
        %v907 = vpop.f32.mrb[0].mxu0
        %908 = vdwg.mxu0
        %v909 = vadd.f32 %v816, %v901
        %v910 = vadd.f32 %v817, %v906
        %911 = vst [vmem:[#allocation2] sm:$0xff] %v909
        %912 = vst [vmem:[#allocation2 + $0x8] sm:$0xff] %v910
        %p913 = scmp.eq.s32.totalorder %s32, 1
        // Predicated region
        $region65: #{tpu_custom_call.1} parent=47 // pred_check
          %p914 = pneg %p913
        $region66: #{tpu_custom_call.1} parent=47 // pred_check_branch
          %916 = sbr.rel (%p914) target = $region68
        $region67: #{tpu_custom_call.1} parent=47 // pred_region
          %v917 = vld [vmem:[#allocation2] sm:$0xff]
          %v918 = vld [vmem:[#allocation2 + $0x8] sm:$0xff]
          %919 = vst [vmem:[%s415] sm:$0xff] %v917
          %920 = vst [vmem:[%s415 + $0x8] sm:$0xff] %v918
        $region68: #{tpu_custom_call.1} parent=47 // pred_fallthru
          _
        %s921 = sand.u32 %s219, 1
        %s922 = scalar_lea.sflag [#allocation5], %s921
        %s923 = sand.u32 %s219, 1
        %s924 = smul.addr %s923, 16
        %s925 = scalar_lea.vmem [#allocation9], %s924
        // Predicated region
        $region69: #{tpu_custom_call.1} parent=47 // pred_check
          %p926 = pneg %p229
        $region70: #{tpu_custom_call.1} parent=47 // pred_check_branch
          %928 = sbr.rel (%p926) target = $region72
        $region71: #{tpu_custom_call.1} parent=47 // pred_region
          %s929 = smul.u32 2, %s31
          %s931 = ssub.s32 256, 256
          %932 = vsyncadd %s922, %s931
          %s933 = smul.addr %s929, 128
          %s934 = scalar_lea.hbm %s7, %s933
          %s935 = sshll.u32 %s925, 4
          %s936 = int_to_ptr.vmem [resolvable:$true] %s935
          %941 = dma.vmem_to_hbm [thread:$0]  %s936, 256, %s934, %s922, 128, 128, 8
        $region72: #{tpu_custom_call.1} parent=47 // pred_fallthru
          _
      $region48: #{tpu_custom_call.1} parent=5 // pred_fallthru
        _
      %p942 = scmp.le.s32.totalorder 2, %s22
      // Predicated region
      $region73: #{tpu_custom_call.1} parent=5 // pred_check
        %p943 = pneg %p942
      $region74: #{tpu_custom_call.1} parent=5 // pred_check_branch
        %945 = sbr.rel (%p943) target = $region76
      $region75: #{tpu_custom_call.1} parent=5 // pred_region
        %s946 = ssub.s32 %s22, 2
        // Predicated region
        $region77: #{tpu_custom_call.1} parent=75 // pred_check
          %p947 = pneg %p235
        $region78: #{tpu_custom_call.1} parent=75 // pred_check_branch
          %949 = sbr.rel (%p947) target = $region80
        $region79: #{tpu_custom_call.1} parent=75 // pred_region
          %s950 = sand.u32 %s220, 1
          %s951 = scalar_lea.sflag [#allocation5], %s950
          %s952 = sand.u32 %s220, 1
          %s953 = smul.addr %s952, 16
          %s954 = scalar_lea.vmem [#allocation9], %s953
          %955 = dma.done %s951, 256
        $region80: #{tpu_custom_call.1} parent=75 // pred_fallthru
          _
      $region76: #{tpu_custom_call.1} parent=5 // pred_fallthru
        _
    $region6: #{tpu_custom_call.1} parent=1 // loop_footer
      %s26 = sadd.s32 1, %s22
    $region7: #{tpu_custom_call.1} parent=1 // loop_footer_branch
      %21 = sbr.rel target = $region3
    $region8: #{tpu_custom_call.1} parent=1 // loop_exit
      _
    %956 = vsyncpa [#allocation4], 1
    %s957 = scalar_lea.sflag [#allocation4], 1
    %958 = vsyncpa %s957, 1
    %959 = vsyncpa [#allocation7], 1
    %s960 = scalar_lea.sflag [#allocation7], 1
    %961 = vsyncpa %s960, 1
    %962 = vsyncpa [#allocation5], 1
    %s963 = scalar_lea.sflag [#allocation5], 1
    %964 = vsyncpa %s963, 1

</llo_original>
